<compile_context>
chip_gen: v5e
topology: v5e:2x2
jax: 0.10.0
libtpu: 0.0.40
codegen_flags: <defaults>
</compile_context>

<pallas_src>
import functools

import jax
import jax.numpy as jnp
from jax.experimental import pallas as pl
from jax.experimental.pallas import tpu as pltpu


def _round_up(n: int, m: int) -> int:
    return ((n + m - 1) // m) * m


def default_compute_dtype():
    """bf16 matmul path on v6e/v7x (native bf16 MXU, halves HBM traffic);
    f32 elsewhere to match PyTorch numerics exactly."""
    try:
        kind = jax.devices()[0].device_kind.lower()
    except Exception:
        return jnp.float32
    if "v6" in kind or "v7" in kind:
        return jnp.bfloat16
    return jnp.float32


def _pick_batch_block(batch: int) -> int:
    """Device-tuned batch tile size."""
    try:
        kind = jax.devices()[0].device_kind.lower()
    except Exception:
        kind = ""
    if "v7" in kind:
        # 2 TensorCores/chip: keep >= 2 (ideally ~4) grid steps so both cores
        # get tiles under dimension_semantics=("parallel",).
        return min(512, _round_up(max((batch + 3) // 4, 128), 128))
    # Single TC (v5e/v6e): big tiles amortize per-step overhead; up to ~1024
    # rows as one block, 512 for the multi-step path.
    return 1024 if batch <= 1024 else 512


def _fused_mlp_kernel(*refs, n_layers: int, compute_dtype):
    """Whole MLP for one batch tile.

    refs = (x, w0, b0, w1, b1, ..., w_{L-1}, b_{L-1}, out)
      x   : [B_blk, F0_pad]          compute_dtype
      w_l : [F_l_pad, F_{l+1}_pad]   compute_dtype (pre-transposed, zero-padded)
      b_l : [1, F_{l+1}_pad]         f32
      out : [B_blk, F_L_pad]         f32
    Intermediates never leave VMEM/vregs.
    """
    x_ref = refs[0]
    o_ref = refs[-1]
    h = x_ref[...]
    for li in range(n_layers):
        w_ref = refs[1 + 2 * li]
        b_ref = refs[2 + 2 * li]
        y = jnp.dot(h, w_ref[...], preferred_element_type=jnp.float32)
        y = y + b_ref[...]                 # bias + ReLU kept in f32 (v5e-safe)
        if li < n_layers - 1:              # ReLU after every layer but the last
            y = jnp.maximum(y, 0.0)
            h = y.astype(compute_dtype)    # keep inter-layer act in compute dtype
        else:
            h = y
    o_ref[...] = h.astype(o_ref.dtype)


def init_params(key, n_inputs, arch, n_outputs):
    """PyTorch-layout params: list of (w [out, in], b [out]) in f32.
    Init mimics nn.Linear default U(-1/sqrt(fan_in), 1/sqrt(fan_in))."""
    dims = [n_inputs] + list(arch) + [n_outputs]
    params = []
    for fan_in, fan_out in zip(dims[:-1], dims[1:]):
        key, kw, kb = jax.random.split(key, 3)
        bound = 1.0 / float(fan_in) ** 0.5
        w = jax.random.uniform(kw, (fan_out, fan_in), jnp.float32, -bound, bound)
        b = jax.random.uniform(kb, (fan_out,), jnp.float32, -bound, bound)
        params.append((w, b))
    return params


def prepare_params(params, compute_dtype=None):
    """One-time transform: transpose to [F_in, F_out], zero-pad both dims to
    multiples of 128 (lane-dense), cast matmul operands to compute_dtype.
    Biases stay f32 (epilogue is always f32)."""
    if compute_dtype is None:
        compute_dtype = default_compute_dtype()
    prepped = []
    for w, b in params:
        f_out, f_in = w.shape
        f_in_p = _round_up(f_in, 128)
        f_out_p = _round_up(f_out, 128)
        w_t = jnp.zeros((f_in_p, f_out_p), compute_dtype)
        w_t = w_t.at[:f_in, :f_out].set(w.T.astype(compute_dtype))
        b_p = jnp.zeros((1, f_out_p), jnp.float32).at[0, :f_out].set(b)
        prepped.append((w_t, b_p))
    return prepped


def neural_network_forward(x, prepped, n_outputs, *, batch_block=None):
    """Forward equivalent to NeuralNetwork.forward: flatten -> fused MLP.
    (In real use wrap this in jax.jit so the flatten/cast fuses upstream.)"""
    batch = x.shape[0]
    n_layers = len(prepped)
    compute_dtype = prepped[0][0].dtype
    dsize = jnp.dtype(compute_dtype).itemsize
    f_in_p = prepped[0][0].shape[0]
    f_out_p = prepped[-1][0].shape[1]

    # nn.Flatten + cast to the compute dtype (bf16 path halves the x DMA).
    h = x.reshape(batch, -1).astype(compute_dtype)
    f_in = h.shape[1]
    assert f_in <= f_in_p, "input feature count does not match params"
    if f_in != f_in_p:
        # Only needed when f_in is not a multiple of 128 (zero columns keep the
        # math exact against the zero-padded weight rows).
        h = jnp.pad(h, ((0, 0), (0, f_in_p - f_in)))

    # Batch tile: device-tuned, but never bigger than the (sublane-aligned)
    # batch itself.  No wrapper-side batch padding -- the ragged last tile is
    # handled by Pallas (OOB output rows masked on store).
    sub = 16 if dsize == 2 else 8
    blk = batch_block if batch_block is not None else _pick_batch_block(batch)
    blk = min(blk, _round_up(batch, sub))
    blk = _round_up(blk, sub)
    num_blocks = pl.cdiv(batch, blk)

    flat_params = [t for wb in prepped for t in wb]
    kernel = functools.partial(_fused_mlp_kernel, n_layers=n_layers,
                               compute_dtype=compute_dtype)

    # Weights/biases: full-extent blocks, constant index_map -> DMA'd once,
    # resident across the batch grid.
    in_specs = [pl.BlockSpec((blk, f_in_p), lambda i: (i, 0))]
    for w_t, b_p in prepped:
        in_specs.append(pl.BlockSpec(w_t.shape, lambda i: (0, 0)))
        in_specs.append(pl.BlockSpec(b_p.shape, lambda i: (0, 0)))
    out_specs = pl.BlockSpec((blk, f_out_p), lambda i: (i, 0))
    out_shape = jax.ShapeDtypeStruct((batch, f_out_p), jnp.float32)

    # VMEM budget (double-buffered x/out blocks + resident weights + headroom).
    w_bytes = sum(int(w.size) * w.dtype.itemsize + int(b.size) * b.dtype.itemsize
                  for w, b in prepped)
    act_w = max(int(w.shape[1]) for w, _ in prepped)
    vmem_bytes = (2 * blk * f_in_p * dsize + 2 * blk * f_out_p * 4
                  + 2 * w_bytes + 2 * blk * act_w * 4)
    vmem_limit = int(min(64 * 1024 * 1024, max(2 * vmem_bytes, 16 * 1024 * 1024)))

    rows = num_blocks * blk
    flops = 2 * rows * sum(int(w.shape[0]) * int(w.shape[1]) for w, _ in prepped)
    bytes_accessed = int(batch * f_in_p * dsize + w_bytes + batch * f_out_p * 4)

    out = pl.pallas_call(
        kernel,
        out_shape=out_shape,
        grid=(num_blocks,),
        in_specs=in_specs,
        out_specs=out_specs,
        compiler_params=pltpu.CompilerParams(
            dimension_semantics=("parallel",),
            vmem_limit_bytes=vmem_limit),
        cost_estimate=pl.CostEstimate(flops=flops, transcendentals=0,
                                      bytes_accessed=bytes_accessed),
    )(h, *flat_params)

    return out[:, :n_outputs]


# Pure-JAX reference (PyTorch-layout params) for correctness checks.
def _reference_forward(x, params):
    h = x.reshape(x.shape[0], -1)
    n_layers = len(params)
    for li, (w, b) in enumerate(params):
        h = h @ w.T + b
        if li < n_layers - 1:
            h = jnp.maximum(h, 0.0)
    return h


if __name__ == "__main__":
    key = jax.random.PRNGKey(0)
    k_x, k_p, k_xb = jax.random.split(key, 3)

    n_inputs = 4 * 16 * 16
    arch = [32, 32]
    n_outputs = 8
    params = init_params(k_p, n_inputs, arch, n_outputs)
    prepped_f32 = prepare_params(params, jnp.float32)
    prepped_bf16 = prepare_params(params, jnp.bfloat16)  # v6e/v7x default path

    # Small NCHW input (B=2, C=4, H=W=16): single small tile.
    x = jax.random.normal(k_x, (2, 4, 16, 16), jnp.float32)
    ref = _reference_forward(x, params)

    logits = jax.block_until_ready(
        neural_network_forward(x, prepped_f32, n_outputs))
    assert logits.shape == (2, n_outputs)
    assert jnp.allclose(logits, ref, atol=1e-4, rtol=1e-4)

    # bf16 weights + bf16 activations (f32 MXU accumulate, f32 epilogue).
    logits_bf16 = jax.block_until_ready(
        neural_network_forward(x, prepped_bf16, n_outputs))
    assert jnp.allclose(logits_bf16, ref, atol=1e-1, rtol=1e-1)

    # Non-block-aligned large batch: multi-step "parallel" grid with an
    # implicitly padded ragged last tile (no wrapper-side padded copy of x).
    x_big = jax.random.normal(k_xb, (250, 4, 16, 16), jnp.float32)
    ref_big = _reference_forward(x_big, params)
    logits_big = jax.block_until_ready(
        neural_network_forward(x_big, prepped_f32, n_outputs, batch_block=128))
    assert logits_big.shape == (250, n_outputs)
    assert jnp.allclose(logits_big, ref_big, atol=1e-4, rtol=1e-4)

    # Device-tuned tile size on the bf16 path.
    logits_big_bf16 = jax.block_until_ready(
        neural_network_forward(x_big, prepped_bf16, n_outputs))
    assert jnp.allclose(logits_big_bf16, ref_big, atol=1e-1, rtol=1e-1)

    print("KERNEL_OK")
</pallas_src>

<mosaic_0001>
module attributes {stable_mosaic.version = 11 : i64} {
  func.func @_fused_mlp_kernel(%arg0: i32, %arg1: memref<8x1024xf32, #tpu.memory_space<vmem>>, %arg2: memref<1024x128xf32, #tpu.memory_space<vmem>>, %arg3: memref<1x128xf32, #tpu.memory_space<vmem>>, %arg4: memref<128x128xf32, #tpu.memory_space<vmem>>, %arg5: memref<1x128xf32, #tpu.memory_space<vmem>>, %arg6: memref<128x128xf32, #tpu.memory_space<vmem>>, %arg7: memref<1x128xf32, #tpu.memory_space<vmem>>, %arg8: memref<8x128xf32, #tpu.memory_space<vmem>>) attributes {dimension_semantics = [#tpu.dimension_semantics<parallel>], iteration_bounds = array<i64: 1>, scalar_prefetch = 0 : i64, scratch_operands = 0 : i64, tpu.core_type = #tpu.core_type<tc>, window_params = [{transform_indices = @transform_0, window_bounds = array<i64: 8, 1024>}, {pipeline_mode = #tpu.pipeline_mode<synchronous>, transform_indices = @transform_1, window_bounds = array<i64: 1024, 128>}, {pipeline_mode = #tpu.pipeline_mode<synchronous>, transform_indices = @transform_2, window_bounds = array<i64: 1, 128>}, {pipeline_mode = #tpu.pipeline_mode<synchronous>, transform_indices = @transform_3, window_bounds = array<i64: 128, 128>}, {pipeline_mode = #tpu.pipeline_mode<synchronous>, transform_indices = @transform_4, window_bounds = array<i64: 1, 128>}, {pipeline_mode = #tpu.pipeline_mode<synchronous>, transform_indices = @transform_5, window_bounds = array<i64: 128, 128>}, {pipeline_mode = #tpu.pipeline_mode<synchronous>, transform_indices = @transform_6, window_bounds = array<i64: 1, 128>}, {transform_indices = @transform_7, window_bounds = array<i64: 8, 128>}]} {
    %c0 = arith.constant 0 : index
    %c0_0 = arith.constant 0 : index
    %0 = vector.load %arg1[%c0, %c0_0] : memref<8x1024xf32, #tpu.memory_space<vmem>>, vector<8x1024xf32>
    %c0_1 = arith.constant 0 : index
    %c0_2 = arith.constant 0 : index
    %1 = vector.load %arg2[%c0_1, %c0_2] : memref<1024x128xf32, #tpu.memory_space<vmem>>, vector<1024x128xf32>
    %cst = arith.constant dense<0.000000e+00> : vector<8x128xf32>
    %2 = tpu.matmul %0, %1, %cst {dimension_numbers = #tpu.dot_dimension_numbers<[1], [0], [0], [1], [0, 0, 1, 1], [], []>} : vector<8x1024xf32>, vector<1024x128xf32>, vector<8x128xf32> -> vector<8x128xf32>
    %c0_3 = arith.constant 0 : index
    %c0_4 = arith.constant 0 : index
    %3 = vector.load %arg3[%c0_3, %c0_4] : memref<1x128xf32, #tpu.memory_space<vmem>>, vector<1x128xf32>
    %4 = vector.broadcast %3 : vector<1x128xf32> to vector<8x128xf32>
    %5 = arith.addf %2, %4 : vector<8x128xf32>
    %cst_5 = arith.constant 0.000000e+00 : f32
    %6 = vector.broadcast %cst_5 : f32 to vector<8x128xf32>
    %7 = arith.maximumf %5, %6 : vector<8x128xf32>
    %c0_6 = arith.constant 0 : index
    %c0_7 = arith.constant 0 : index
    %8 = vector.load %arg4[%c0_6, %c0_7] : memref<128x128xf32, #tpu.memory_space<vmem>>, vector<128x128xf32>
    %cst_8 = arith.constant dense<0.000000e+00> : vector<8x128xf32>
    %9 = tpu.matmul %7, %8, %cst_8 {dimension_numbers = #tpu.dot_dimension_numbers<[1], [0], [0], [1], [0, 0, 1, 1], [], []>} : vector<8x128xf32>, vector<128x128xf32>, vector<8x128xf32> -> vector<8x128xf32>
    %c0_9 = arith.constant 0 : index
    %c0_10 = arith.constant 0 : index
    %10 = vector.load %arg5[%c0_9, %c0_10] : memref<1x128xf32, #tpu.memory_space<vmem>>, vector<1x128xf32>
    %11 = vector.broadcast %10 : vector<1x128xf32> to vector<8x128xf32>
    %12 = arith.addf %9, %11 : vector<8x128xf32>
    %cst_11 = arith.constant 0.000000e+00 : f32
    %13 = vector.broadcast %cst_11 : f32 to vector<8x128xf32>
    %14 = arith.maximumf %12, %13 : vector<8x128xf32>
    %c0_12 = arith.constant 0 : index
    %c0_13 = arith.constant 0 : index
    %15 = vector.load %arg6[%c0_12, %c0_13] : memref<128x128xf32, #tpu.memory_space<vmem>>, vector<128x128xf32>
    %cst_14 = arith.constant dense<0.000000e+00> : vector<8x128xf32>
    %16 = tpu.matmul %14, %15, %cst_14 {dimension_numbers = #tpu.dot_dimension_numbers<[1], [0], [0], [1], [0, 0, 1, 1], [], []>} : vector<8x128xf32>, vector<128x128xf32>, vector<8x128xf32> -> vector<8x128xf32>
    %c0_15 = arith.constant 0 : index
    %c0_16 = arith.constant 0 : index
    %17 = vector.load %arg7[%c0_15, %c0_16] : memref<1x128xf32, #tpu.memory_space<vmem>>, vector<1x128xf32>
    %18 = vector.broadcast %17 : vector<1x128xf32> to vector<8x128xf32>
    %19 = arith.addf %16, %18 : vector<8x128xf32>
    %c0_17 = arith.constant 0 : index
    %c0_18 = arith.constant 0 : index
    %20 = vector.load %arg8[%c0_17, %c0_18] : memref<8x128xf32, #tpu.memory_space<vmem>>, vector<8x128xf32>
    tpu.vector_store %arg8[%c0_17, %c0_18], %19 {strides = array<i32>} : memref<8x128xf32, #tpu.memory_space<vmem>>, vector<8x128xf32>,
    return
  }
  func.func @transform_0(%arg0: i32) -> (i32, i32) {
    %c0_i32 = arith.constant 0 : i32
    %c0_i32_0 = arith.constant 0 : i32
    return %arg0, %c0_i32 : i32, i32
  }
  func.func @transform_1(%arg0: i32) -> (i32, i32) {
    %c0_i32 = arith.constant 0 : i32
    %c0_i32_0 = arith.constant 0 : i32
    %c0_i32_1 = arith.constant 0 : i32
    return %c0_i32, %c0_i32_0 : i32, i32
  }
  func.func @transform_2(%arg0: i32) -> (i32, i32) {
    %c0_i32 = arith.constant 0 : i32
    %c0_i32_0 = arith.constant 0 : i32
    %c0_i32_1 = arith.constant 0 : i32
    return %c0_i32, %c0_i32_0 : i32, i32
  }
  func.func @transform_3(%arg0: i32) -> (i32, i32) {
    %c0_i32 = arith.constant 0 : i32
    %c0_i32_0 = arith.constant 0 : i32
    %c0_i32_1 = arith.constant 0 : i32
    return %c0_i32, %c0_i32_0 : i32, i32
  }
  func.func @transform_4(%arg0: i32) -> (i32, i32) {
    %c0_i32 = arith.constant 0 : i32
    %c0_i32_0 = arith.constant 0 : i32
    %c0_i32_1 = arith.constant 0 : i32
    return %c0_i32, %c0_i32_0 : i32, i32
  }
  func.func @transform_5(%arg0: i32) -> (i32, i32) {
    %c0_i32 = arith.constant 0 : i32
    %c0_i32_0 = arith.constant 0 : i32
    %c0_i32_1 = arith.constant 0 : i32
    return %c0_i32, %c0_i32_0 : i32, i32
  }
  func.func @transform_6(%arg0: i32) -> (i32, i32) {
    %c0_i32 = arith.constant 0 : i32
    %c0_i32_0 = arith.constant 0 : i32
    %c0_i32_1 = arith.constant 0 : i32
    return %c0_i32, %c0_i32_0 : i32, i32
  }
  func.func @transform_7(%arg0: i32) -> (i32, i32) {
    %c0_i32 = arith.constant 0 : i32
    %c0_i32_0 = arith.constant 0 : i32
    return %arg0, %c0_i32 : i32, i32
  }
}

</mosaic_0001>

<llo_original>
// kernel: tpu_custom_call.1
$region0: #{tpu_custom_call.1}
  #allocation0 [shape = 'u32[]', space=smem, size = 0x4, offset = 0x4, fixed_abs, tag = 'smem constant byte address 0x4 - core index']
  #allocation1 [shape = 'u32[72,128]{1,0:T(1,128)}', space=vmem, size = 0x9000, scoped, tag = 'internal scratch']
  %s0 = inlined_call_operand.hbm [shape: f32[2,1024], index: 0, kind: input, shape index: {}]
  %s1 = inlined_call_operand.hbm [shape: f32[1024,128], index: 1, kind: input, shape index: {}]
  %s2 = inlined_call_operand.vmem [shape: f32[1,128], index: 2, kind: input, shape index: {}]
  %s3 = inlined_call_operand.hbm [shape: f32[128,128], index: 3, kind: input, shape index: {}]
  %s4 = inlined_call_operand.vmem [shape: f32[1,128], index: 4, kind: input, shape index: {}]
  %s5 = inlined_call_operand.hbm [shape: f32[128,128], index: 5, kind: input, shape index: {}]
  %s6 = inlined_call_operand.vmem [shape: f32[1,128], index: 6, kind: input, shape index: {}]
  %s7 = inlined_call_operand.hbm [shape: f32[2,128], index: 7, kind: output, shape index: {}]
  %s8 = sld [smem:[#allocation0]]
  $region54: #{tpu_custom_call.1} parent=0
    _
  %s10 = ssub.s32 1, %s8
  %s11 = scalar_select 0, %s10, %s8
  $region1: #{tpu_custom_call.1} parent=0
    #allocation2 [shape = 'u8[32768]{0}', space=vmem, size = 0x8000, scoped, tag = 'input window, operand 0, single buffered']
    #allocation3 [shape = 's32[1]{0}', space=sflag, size = 0x4, scoped, tag = 'scoped memory for tpu_custom_call.1']
    #allocation4 [shape = 's32[1]{0}', space=sflag, size = 0x4, scoped, tag = 'scoped memory for tpu_custom_call.1']
    #allocation5 [shape = 'u8[524288]{0}', space=vmem, size = 0x80000, scoped, tag = 'input window, operand 1, single buffered']
    #allocation6 [shape = 's32[1]{0}', space=sflag, size = 0x4, scoped, tag = 'scoped memory for tpu_custom_call.1']
    #allocation7 [shape = 'u8[65536]{0}', space=vmem, size = 0x10000, scoped, tag = 'input window, operand 3, single buffered']
    #allocation8 [shape = 'u8[65536]{0}', space=vmem, size = 0x10000, scoped, tag = 'input window, operand 5, single buffered']
    #allocation9 [shape = 's32[1]{0}', space=sflag, size = 0x4, scoped, tag = 'scoped memory for tpu_custom_call.1']
    #allocation10 [shape = 'u8[4096]{0}', space=vmem, size = 0x1000, scoped, tag = 'output window, operand 0, single buffered']
    %12 = vsyncpa [#allocation3], 0
    %13 = vsyncpa [#allocation6], 0
    %14 = vsyncpa [#allocation9], 0
    %15 = vsyncpa [#allocation4], 0
    // Predicated region
    $region2: #{tpu_custom_call.1} parent=1 // pred_check
      _
    $region3: #{tpu_custom_call.1} parent=1 // pred_check_branch
      %17 = sbr.rel (0) target = $region5
    $region4: #{tpu_custom_call.1} parent=1 // pred_region
      %19 = vsyncadd [#allocation3], 768
      %s20 = sshll.u32 %s0, 4
      %s21 = int_to_ptr.hbm [resolvable:$true] %s20
      %s22 = sshll.u32 [#allocation2], 4
      %s23 = int_to_ptr.vmem [resolvable:$true] %s22
      %28 = dma.hbm_to_vmem [thread:$0]  %s21, 256, %s23, [#allocation3], 256, 256, 16
    $region5: #{tpu_custom_call.1} parent=1 // pred_fallthru
      _
    // Predicated region
    $region6: #{tpu_custom_call.1} parent=1 // pred_check
      _
    $region7: #{tpu_custom_call.1} parent=1 // pred_check_branch
      %30 = sbr.rel (0) target = $region9
    $region8: #{tpu_custom_call.1} parent=1 // pred_region
      %32 = vsyncadd [#allocation6], 0
      %s33 = sshll.u32 %s1, 4
      %s34 = int_to_ptr.hbm [resolvable:$true] %s33
      %s35 = sshll.u32 [#allocation5], 4
      %s36 = int_to_ptr.vmem [resolvable:$true] %s35
      %41 = dma.hbm_to_vmem [thread:$0]  %s34, 16384, %s36, [#allocation6], 128, 128, 8
    $region9: #{tpu_custom_call.1} parent=1 // pred_fallthru
      _
    // Predicated region
    $region10: #{tpu_custom_call.1} parent=1 // pred_check
      _
    $region11: #{tpu_custom_call.1} parent=1 // pred_check_branch
      %43 = sbr.rel (0) target = $region13
    $region12: #{tpu_custom_call.1} parent=1 // pred_region
      _
    $region13: #{tpu_custom_call.1} parent=1 // pred_fallthru
      _
    // Predicated region
    $region14: #{tpu_custom_call.1} parent=1 // pred_check
      _
    $region15: #{tpu_custom_call.1} parent=1 // pred_check_branch
      %45 = sbr.rel (0) target = $region17
    $region16: #{tpu_custom_call.1} parent=1 // pred_region
      %47 = vsyncadd [#allocation6], 0
      %s48 = sshll.u32 %s3, 4
      %s49 = int_to_ptr.hbm [resolvable:$true] %s48
      %s50 = sshll.u32 [#allocation7], 4
      %s51 = int_to_ptr.vmem [resolvable:$true] %s50
      %56 = dma.hbm_to_vmem [thread:$0]  %s49, 2048, %s51, [#allocation6], 128, 128, 8
    $region17: #{tpu_custom_call.1} parent=1 // pred_fallthru
      _
    // Predicated region
    $region18: #{tpu_custom_call.1} parent=1 // pred_check
      _
    $region19: #{tpu_custom_call.1} parent=1 // pred_check_branch
      %58 = sbr.rel (0) target = $region21
    $region20: #{tpu_custom_call.1} parent=1 // pred_region
      _
    $region21: #{tpu_custom_call.1} parent=1 // pred_fallthru
      _
    // Predicated region
    $region22: #{tpu_custom_call.1} parent=1 // pred_check
      _
    $region23: #{tpu_custom_call.1} parent=1 // pred_check_branch
      %60 = sbr.rel (0) target = $region25
    $region24: #{tpu_custom_call.1} parent=1 // pred_region
      %62 = vsyncadd [#allocation9], 0
      %s63 = sshll.u32 %s5, 4
      %s64 = int_to_ptr.hbm [resolvable:$true] %s63
      %s65 = sshll.u32 [#allocation8], 4
      %s66 = int_to_ptr.vmem [resolvable:$true] %s65
      %71 = dma.hbm_to_vmem [thread:$0]  %s64, 2048, %s66, [#allocation9], 128, 128, 8
    $region25: #{tpu_custom_call.1} parent=1 // pred_fallthru
      _
    // Predicated region
    $region26: #{tpu_custom_call.1} parent=1 // pred_check
      _
    $region27: #{tpu_custom_call.1} parent=1 // pred_check_branch
      %73 = sbr.rel (0) target = $region29
    $region28: #{tpu_custom_call.1} parent=1 // pred_region
      _
    $region29: #{tpu_custom_call.1} parent=1 // pred_fallthru
      _
    // Predicated region
    $region30: #{tpu_custom_call.1} parent=1 // pred_check
      _
    $region31: #{tpu_custom_call.1} parent=1 // pred_check_branch
      %75 = sbr.rel (0) target = $region33
    $region32: #{tpu_custom_call.1} parent=1 // pred_region
      %77 = dma.done [#allocation3], 1024
    $region33: #{tpu_custom_call.1} parent=1 // pred_fallthru
      _
    // Predicated region
    $region34: #{tpu_custom_call.1} parent=1 // pred_check
      _
    $region35: #{tpu_custom_call.1} parent=1 // pred_check_branch
      %79 = sbr.rel (0) target = $region37
    $region36: #{tpu_custom_call.1} parent=1 // pred_region
      %81 = dma.done [#allocation6], 16384
    $region37: #{tpu_custom_call.1} parent=1 // pred_fallthru
      _
    // Predicated region
    $region38: #{tpu_custom_call.1} parent=1 // pred_check
      _
    $region39: #{tpu_custom_call.1} parent=1 // pred_check_branch
      %83 = sbr.rel (0) target = $region41
    $region40: #{tpu_custom_call.1} parent=1 // pred_region
      %85 = dma.done [#allocation6], 2048
    $region41: #{tpu_custom_call.1} parent=1 // pred_fallthru
      _
    // Predicated region
    $region42: #{tpu_custom_call.1} parent=1 // pred_check
      _
    $region43: #{tpu_custom_call.1} parent=1 // pred_check_branch
      %87 = sbr.rel (0) target = $region45
    $region44: #{tpu_custom_call.1} parent=1 // pred_region
      %89 = dma.done [#allocation9], 2048
    $region45: #{tpu_custom_call.1} parent=1 // pred_fallthru
      _
    %v90 = vld [vmem:[#allocation2] sm:$0xff]
    %v91 = vld [vmem:[#allocation2 + $0x8] sm:$0xff]
    %v92 = vld [vmem:[#allocation2 + $0x10] sm:$0xff]
    %v93 = vld [vmem:[#allocation2 + $0x18] sm:$0xff]
    %v94 = vld [vmem:[#allocation2 + $0x20] sm:$0xff]
    %v95 = vld [vmem:[#allocation2 + $0x28] sm:$0xff]
    %v96 = vld [vmem:[#allocation2 + $0x30] sm:$0xff]
    %v97 = vld [vmem:[#allocation2 + $0x38] sm:$0xff]
    %v98 = vld [vmem:[#allocation5] sm:$0xff]
    %v99 = vld [vmem:[#allocation5 + $0x8] sm:$0xff]
    %v100 = vld [vmem:[#allocation5 + $0x10] sm:$0xff]
    %v101 = vld [vmem:[#allocation5 + $0x18] sm:$0xff]
    %v102 = vld [vmem:[#allocation5 + $0x20] sm:$0xff]
    %v103 = vld [vmem:[#allocation5 + $0x28] sm:$0xff]
    %v104 = vld [vmem:[#allocation5 + $0x30] sm:$0xff]
    %v105 = vld [vmem:[#allocation5 + $0x38] sm:$0xff]
    %v106 = vld [vmem:[#allocation5 + $0x40] sm:$0xff]
    %v107 = vld [vmem:[#allocation5 + $0x48] sm:$0xff]
    %v108 = vld [vmem:[#allocation5 + $0x50] sm:$0xff]
    %v109 = vld [vmem:[#allocation5 + $0x58] sm:$0xff]
    %v110 = vld [vmem:[#allocation5 + $0x60] sm:$0xff]
    %v111 = vld [vmem:[#allocation5 + $0x68] sm:$0xff]
    %v112 = vld [vmem:[#allocation5 + $0x70] sm:$0xff]
    %v113 = vld [vmem:[#allocation5 + $0x78] sm:$0xff]
    %v114 = vld [vmem:[#allocation5 + $0x80] sm:$0xff]
    %v115 = vld [vmem:[#allocation5 + $0x88] sm:$0xff]
    %v116 = vld [vmem:[#allocation5 + $0x90] sm:$0xff]
    %v117 = vld [vmem:[#allocation5 + $0x98] sm:$0xff]
    %v118 = vld [vmem:[#allocation5 + $0xa0] sm:$0xff]
    %v119 = vld [vmem:[#allocation5 + $0xa8] sm:$0xff]
    %v120 = vld [vmem:[#allocation5 + $0xb0] sm:$0xff]
    %v121 = vld [vmem:[#allocation5 + $0xb8] sm:$0xff]
    %v122 = vld [vmem:[#allocation5 + $0xc0] sm:$0xff]
    %v123 = vld [vmem:[#allocation5 + $0xc8] sm:$0xff]
    %v124 = vld [vmem:[#allocation5 + $0xd0] sm:$0xff]
    %v125 = vld [vmem:[#allocation5 + $0xd8] sm:$0xff]
    %v126 = vld [vmem:[#allocation5 + $0xe0] sm:$0xff]
    %v127 = vld [vmem:[#allocation5 + $0xe8] sm:$0xff]
    %v128 = vld [vmem:[#allocation5 + $0xf0] sm:$0xff]
    %v129 = vld [vmem:[#allocation5 + $0xf8] sm:$0xff]
    %v130 = vld [vmem:[#allocation5 + $0x100] sm:$0xff]
    %v131 = vld [vmem:[#allocation5 + $0x108] sm:$0xff]
    %v132 = vld [vmem:[#allocation5 + $0x110] sm:$0xff]
    %v133 = vld [vmem:[#allocation5 + $0x118] sm:$0xff]
    %v134 = vld [vmem:[#allocation5 + $0x120] sm:$0xff]
    %v135 = vld [vmem:[#allocation5 + $0x128] sm:$0xff]
    %v136 = vld [vmem:[#allocation5 + $0x130] sm:$0xff]
    %v137 = vld [vmem:[#allocation5 + $0x138] sm:$0xff]
    %v138 = vld [vmem:[#allocation5 + $0x140] sm:$0xff]
    %v139 = vld [vmem:[#allocation5 + $0x148] sm:$0xff]
    %v140 = vld [vmem:[#allocation5 + $0x150] sm:$0xff]
    %v141 = vld [vmem:[#allocation5 + $0x158] sm:$0xff]
    %v142 = vld [vmem:[#allocation5 + $0x160] sm:$0xff]
    %v143 = vld [vmem:[#allocation5 + $0x168] sm:$0xff]
    %v144 = vld [vmem:[#allocation5 + $0x170] sm:$0xff]
    %v145 = vld [vmem:[#allocation5 + $0x178] sm:$0xff]
    %v146 = vld [vmem:[#allocation5 + $0x180] sm:$0xff]
    %v147 = vld [vmem:[#allocation5 + $0x188] sm:$0xff]
    %v148 = vld [vmem:[#allocation5 + $0x190] sm:$0xff]
    %v149 = vld [vmem:[#allocation5 + $0x198] sm:$0xff]
    %v150 = vld [vmem:[#allocation5 + $0x1a0] sm:$0xff]
    %v151 = vld [vmem:[#allocation5 + $0x1a8] sm:$0xff]
    %v152 = vld [vmem:[#allocation5 + $0x1b0] sm:$0xff]
    %v153 = vld [vmem:[#allocation5 + $0x1b8] sm:$0xff]
    %v154 = vld [vmem:[#allocation5 + $0x1c0] sm:$0xff]
    %v155 = vld [vmem:[#allocation5 + $0x1c8] sm:$0xff]
    %v156 = vld [vmem:[#allocation5 + $0x1d0] sm:$0xff]
    %v157 = vld [vmem:[#allocation5 + $0x1d8] sm:$0xff]
    %v158 = vld [vmem:[#allocation5 + $0x1e0] sm:$0xff]
    %v159 = vld [vmem:[#allocation5 + $0x1e8] sm:$0xff]
    %v160 = vld [vmem:[#allocation5 + $0x1f0] sm:$0xff]
    %v161 = vld [vmem:[#allocation5 + $0x1f8] sm:$0xff]
    %v162 = vld [vmem:[#allocation5 + $0x200] sm:$0xff]
    %v163 = vld [vmem:[#allocation5 + $0x208] sm:$0xff]
    %v164 = vld [vmem:[#allocation5 + $0x210] sm:$0xff]
    %v165 = vld [vmem:[#allocation5 + $0x218] sm:$0xff]
    %v166 = vld [vmem:[#allocation5 + $0x220] sm:$0xff]
    %v167 = vld [vmem:[#allocation5 + $0x228] sm:$0xff]
    %v168 = vld [vmem:[#allocation5 + $0x230] sm:$0xff]
    %v169 = vld [vmem:[#allocation5 + $0x238] sm:$0xff]
    %v170 = vld [vmem:[#allocation5 + $0x240] sm:$0xff]
    %v171 = vld [vmem:[#allocation5 + $0x248] sm:$0xff]
    %v172 = vld [vmem:[#allocation5 + $0x250] sm:$0xff]
    %v173 = vld [vmem:[#allocation5 + $0x258] sm:$0xff]
    %v174 = vld [vmem:[#allocation5 + $0x260] sm:$0xff]
    %v175 = vld [vmem:[#allocation5 + $0x268] sm:$0xff]
    %v176 = vld [vmem:[#allocation5 + $0x270] sm:$0xff]
    %v177 = vld [vmem:[#allocation5 + $0x278] sm:$0xff]
    %v178 = vld [vmem:[#allocation5 + $0x280] sm:$0xff]
    %v179 = vld [vmem:[#allocation5 + $0x288] sm:$0xff]
    %v180 = vld [vmem:[#allocation5 + $0x290] sm:$0xff]
    %v181 = vld [vmem:[#allocation5 + $0x298] sm:$0xff]
    %v182 = vld [vmem:[#allocation5 + $0x2a0] sm:$0xff]
    %v183 = vld [vmem:[#allocation5 + $0x2a8] sm:$0xff]
    %v184 = vld [vmem:[#allocation5 + $0x2b0] sm:$0xff]
    %v185 = vld [vmem:[#allocation5 + $0x2b8] sm:$0xff]
    %v186 = vld [vmem:[#allocation5 + $0x2c0] sm:$0xff]
    %v187 = vld [vmem:[#allocation5 + $0x2c8] sm:$0xff]
    %v188 = vld [vmem:[#allocation5 + $0x2d0] sm:$0xff]
    %v189 = vld [vmem:[#allocation5 + $0x2d8] sm:$0xff]
    %v190 = vld [vmem:[#allocation5 + $0x2e0] sm:$0xff]
    %v191 = vld [vmem:[#allocation5 + $0x2e8] sm:$0xff]
    %v192 = vld [vmem:[#allocation5 + $0x2f0] sm:$0xff]
    %v193 = vld [vmem:[#allocation5 + $0x2f8] sm:$0xff]
    %v194 = vld [vmem:[#allocation5 + $0x300] sm:$0xff]
    %v195 = vld [vmem:[#allocation5 + $0x308] sm:$0xff]
    %v196 = vld [vmem:[#allocation5 + $0x310] sm:$0xff]
    %v197 = vld [vmem:[#allocation5 + $0x318] sm:$0xff]
    %v198 = vld [vmem:[#allocation5 + $0x320] sm:$0xff]
    %v199 = vld [vmem:[#allocation5 + $0x328] sm:$0xff]
    %v200 = vld [vmem:[#allocation5 + $0x330] sm:$0xff]
    %v201 = vld [vmem:[#allocation5 + $0x338] sm:$0xff]
    %v202 = vld [vmem:[#allocation5 + $0x340] sm:$0xff]
    %v203 = vld [vmem:[#allocation5 + $0x348] sm:$0xff]
    %v204 = vld [vmem:[#allocation5 + $0x350] sm:$0xff]
    %v205 = vld [vmem:[#allocation5 + $0x358] sm:$0xff]
    %v206 = vld [vmem:[#allocation5 + $0x360] sm:$0xff]
    %v207 = vld [vmem:[#allocation5 + $0x368] sm:$0xff]
    %v208 = vld [vmem:[#allocation5 + $0x370] sm:$0xff]
    %v209 = vld [vmem:[#allocation5 + $0x378] sm:$0xff]
    %v210 = vld [vmem:[#allocation5 + $0x380] sm:$0xff]
    %v211 = vld [vmem:[#allocation5 + $0x388] sm:$0xff]
    %v212 = vld [vmem:[#allocation5 + $0x390] sm:$0xff]
    %v213 = vld [vmem:[#allocation5 + $0x398] sm:$0xff]
    %v214 = vld [vmem:[#allocation5 + $0x3a0] sm:$0xff]
    %v215 = vld [vmem:[#allocation5 + $0x3a8] sm:$0xff]
    %v216 = vld [vmem:[#allocation5 + $0x3b0] sm:$0xff]
    %v217 = vld [vmem:[#allocation5 + $0x3b8] sm:$0xff]
    %v218 = vld [vmem:[#allocation5 + $0x3c0] sm:$0xff]
    %v219 = vld [vmem:[#allocation5 + $0x3c8] sm:$0xff]
    %v220 = vld [vmem:[#allocation5 + $0x3d0] sm:$0xff]
    %v221 = vld [vmem:[#allocation5 + $0x3d8] sm:$0xff]
    %v222 = vld [vmem:[#allocation5 + $0x3e0] sm:$0xff]
    %v223 = vld [vmem:[#allocation5 + $0x3e8] sm:$0xff]
    %v224 = vld [vmem:[#allocation5 + $0x3f0] sm:$0xff]
    %v225 = vld [vmem:[#allocation5 + $0x3f8] sm:$0xff]
    %v226 = vld [vmem:[%s2] sm:$0x1]
    %v228 = vperm.slane %v226, 0
    %238 = vst [vmem:[#allocation1] ss:$4 sm:$0xff] %v90
    %s239 = scalar_lea.vmem [#allocation1], 1
    %240 = vst [vmem:[%s239] ss:$4 sm:$0xff] %v92
    %s241 = scalar_lea.vmem [#allocation1], 2
    %242 = vst [vmem:[%s241] ss:$4 sm:$0xff] %v94
    %s243 = scalar_lea.vmem [#allocation1], 3
    %244 = vst [vmem:[%s243] ss:$4 sm:$0xff] %v96
    %s245 = scalar_lea.vmem [#allocation1], 32
    %246 = vst [vmem:[%s245] ss:$4 sm:$0xff] %v91
    %s247 = scalar_lea.vmem [#allocation1], 33
    %248 = vst [vmem:[%s247] ss:$4 sm:$0xff] %v93
    %s249 = scalar_lea.vmem [#allocation1], 34
    %250 = vst [vmem:[%s249] ss:$4 sm:$0xff] %v95
    %s251 = scalar_lea.vmem [#allocation1], 35
    %252 = vst [vmem:[%s251] ss:$4 sm:$0xff] %v97
    %v253 = vld.sshfl [vmem:[#allocation1] sm:$0xff pattern:$0x73625140]
    %v254 = vld.sshfl [vmem:[#allocation1 + $0x8] sm:$0xff pattern:$0x73625140]
    %v255 = vld.sshfl [vmem:[#allocation1 + $0x10] sm:$0xff pattern:$0x73625140]
    %v256 = vld.sshfl [vmem:[#allocation1 + $0x18] sm:$0xff pattern:$0x73625140]
    %v257 = vld.sshfl [vmem:[#allocation1 + $0x20] sm:$0xff pattern:$0x73625140]
    %v258 = vld.sshfl [vmem:[#allocation1 + $0x28] sm:$0xff pattern:$0x73625140]
    %v259 = vld.sshfl [vmem:[#allocation1 + $0x30] sm:$0xff pattern:$0x73625140]
    %v260 = vld.sshfl [vmem:[#allocation1 + $0x38] sm:$0xff pattern:$0x73625140]
    %269 = vmatpush.msra.mxu0 %v113
    %270 = vmatpush.msra.mxu0 %v112
    %271 = vmatpush.msra.mxu0 %v111
    %272 = vmatpush.msra.mxu0 %v110
    %273 = vmatpush.msra.mxu0 %v109
    %274 = vmatpush.msra.mxu0 %v108
    %275 = vmatpush.msra.mxu0 %v107
    %276 = vmatpush.msra.mxu0 %v106
    %277 = vmatpush.msra.mxu0 %v105
    %278 = vmatpush.msra.mxu0 %v104
    %279 = vmatpush.msra.mxu0 %v103
    %280 = vmatpush.msra.mxu0 %v102
    %281 = vmatpush.msra.mxu0 %v101
    %282 = vmatpush.msra.mxu0 %v100
    %283 = vmatpush.msra.mxu0 %v99
    %284 = vmatpush.msra.mxu0 %v98
    %285 = vmatmul.f32.gmra.mxu0 %v253
    %v286 = vpop.f32.mrf.mxu0
    %v287 = vadd.f32 %v228, %v286
    %288 = vdwg.mxu0
    %289 = vmatpush.msra.mxu0 %v129
    %290 = vmatpush.msra.mxu0 %v128
    %291 = vmatpush.msra.mxu0 %v127
    %292 = vmatpush.msra.mxu0 %v126
    %293 = vmatpush.msra.mxu0 %v125
    %294 = vmatpush.msra.mxu0 %v124
    %295 = vmatpush.msra.mxu0 %v123
    %296 = vmatpush.msra.mxu0 %v122
    %297 = vmatpush.msra.mxu0 %v121
    %298 = vmatpush.msra.mxu0 %v120
    %299 = vmatpush.msra.mxu0 %v119
    %300 = vmatpush.msra.mxu0 %v118
    %301 = vmatpush.msra.mxu0 %v117
    %302 = vmatpush.msra.mxu0 %v116
    %303 = vmatpush.msra.mxu0 %v115
    %304 = vmatpush.msra.mxu0 %v114
    %305 = vmatmul.f32.gmra.mxu0 %v254
    %v306 = vpop.f32.mrf.mxu0
    %v307 = vadd.f32 %v287, %v306
    %308 = vdwg.mxu0
    %309 = vmatpush.msra.mxu0 %v145
    %310 = vmatpush.msra.mxu0 %v144
    %311 = vmatpush.msra.mxu0 %v143
    %312 = vmatpush.msra.mxu0 %v142
    %313 = vmatpush.msra.mxu0 %v141
    %314 = vmatpush.msra.mxu0 %v140
    %315 = vmatpush.msra.mxu0 %v139
    %316 = vmatpush.msra.mxu0 %v138
    %317 = vmatpush.msra.mxu0 %v137
    %318 = vmatpush.msra.mxu0 %v136
    %319 = vmatpush.msra.mxu0 %v135
    %320 = vmatpush.msra.mxu0 %v134
    %321 = vmatpush.msra.mxu0 %v133
    %322 = vmatpush.msra.mxu0 %v132
    %323 = vmatpush.msra.mxu0 %v131
    %324 = vmatpush.msra.mxu0 %v130
    %325 = vmatmul.f32.gmra.mxu0 %v255
    %v326 = vpop.f32.mrf.mxu0
    %v327 = vadd.f32 %v307, %v326
    %328 = vdwg.mxu0
    %329 = vmatpush.msra.mxu0 %v161
    %330 = vmatpush.msra.mxu0 %v160
    %331 = vmatpush.msra.mxu0 %v159
    %332 = vmatpush.msra.mxu0 %v158
    %333 = vmatpush.msra.mxu0 %v157
    %334 = vmatpush.msra.mxu0 %v156
    %335 = vmatpush.msra.mxu0 %v155
    %336 = vmatpush.msra.mxu0 %v154
    %337 = vmatpush.msra.mxu0 %v153
    %338 = vmatpush.msra.mxu0 %v152
    %339 = vmatpush.msra.mxu0 %v151
    %340 = vmatpush.msra.mxu0 %v150
    %341 = vmatpush.msra.mxu0 %v149
    %342 = vmatpush.msra.mxu0 %v148
    %343 = vmatpush.msra.mxu0 %v147
    %344 = vmatpush.msra.mxu0 %v146
    %345 = vmatmul.f32.gmra.mxu0 %v256
    %v346 = vpop.f32.mrf.mxu0
    %v347 = vadd.f32 %v327, %v346
    %348 = vdwg.mxu0
    %349 = vmatpush.msra.mxu0 %v177
    %350 = vmatpush.msra.mxu0 %v176
    %351 = vmatpush.msra.mxu0 %v175
    %352 = vmatpush.msra.mxu0 %v174
    %353 = vmatpush.msra.mxu0 %v173
    %354 = vmatpush.msra.mxu0 %v172
    %355 = vmatpush.msra.mxu0 %v171
    %356 = vmatpush.msra.mxu0 %v170
    %357 = vmatpush.msra.mxu0 %v169
    %358 = vmatpush.msra.mxu0 %v168
    %359 = vmatpush.msra.mxu0 %v167
    %360 = vmatpush.msra.mxu0 %v166
    %361 = vmatpush.msra.mxu0 %v165
    %362 = vmatpush.msra.mxu0 %v164
    %363 = vmatpush.msra.mxu0 %v163
    %364 = vmatpush.msra.mxu0 %v162
    %365 = vmatmul.f32.gmra.mxu0 %v257
    %v366 = vpop.f32.mrf.mxu0
    %v367 = vadd.f32 %v347, %v366
    %368 = vdwg.mxu0
    %369 = vmatpush.msra.mxu0 %v193
    %370 = vmatpush.msra.mxu0 %v192
    %371 = vmatpush.msra.mxu0 %v191
    %372 = vmatpush.msra.mxu0 %v190
    %373 = vmatpush.msra.mxu0 %v189
    %374 = vmatpush.msra.mxu0 %v188
    %375 = vmatpush.msra.mxu0 %v187
    %376 = vmatpush.msra.mxu0 %v186
    %377 = vmatpush.msra.mxu0 %v185
    %378 = vmatpush.msra.mxu0 %v184
    %379 = vmatpush.msra.mxu0 %v183
    %380 = vmatpush.msra.mxu0 %v182
    %381 = vmatpush.msra.mxu0 %v181
    %382 = vmatpush.msra.mxu0 %v180
    %383 = vmatpush.msra.mxu0 %v179
    %384 = vmatpush.msra.mxu0 %v178
    %385 = vmatmul.f32.gmra.mxu0 %v258
    %v386 = vpop.f32.mrf.mxu0
    %v387 = vadd.f32 %v367, %v386
    %388 = vdwg.mxu0
    %389 = vmatpush.msra.mxu0 %v209
    %390 = vmatpush.msra.mxu0 %v208
    %391 = vmatpush.msra.mxu0 %v207
    %392 = vmatpush.msra.mxu0 %v206
    %393 = vmatpush.msra.mxu0 %v205
    %394 = vmatpush.msra.mxu0 %v204
    %395 = vmatpush.msra.mxu0 %v203
    %396 = vmatpush.msra.mxu0 %v202
    %397 = vmatpush.msra.mxu0 %v201
    %398 = vmatpush.msra.mxu0 %v200
    %399 = vmatpush.msra.mxu0 %v199
    %400 = vmatpush.msra.mxu0 %v198
    %401 = vmatpush.msra.mxu0 %v197
    %402 = vmatpush.msra.mxu0 %v196
    %403 = vmatpush.msra.mxu0 %v195
    %404 = vmatpush.msra.mxu0 %v194
    %405 = vmatmul.f32.gmra.mxu0 %v259
    %v406 = vpop.f32.mrf.mxu0
    %v407 = vadd.f32 %v387, %v406
    %408 = vdwg.mxu0
    %409 = vmatpush.msra.mxu0 %v225
    %410 = vmatpush.msra.mxu0 %v224
    %411 = vmatpush.msra.mxu0 %v223
    %412 = vmatpush.msra.mxu0 %v222
    %413 = vmatpush.msra.mxu0 %v221
    %414 = vmatpush.msra.mxu0 %v220
    %415 = vmatpush.msra.mxu0 %v219
    %416 = vmatpush.msra.mxu0 %v218
    %417 = vmatpush.msra.mxu0 %v217
    %418 = vmatpush.msra.mxu0 %v216
    %419 = vmatpush.msra.mxu0 %v215
    %420 = vmatpush.msra.mxu0 %v214
    %421 = vmatpush.msra.mxu0 %v213
    %422 = vmatpush.msra.mxu0 %v212
    %423 = vmatpush.msra.mxu0 %v211
    %424 = vmatpush.msra.mxu0 %v210
    %425 = vmatmul.f32.gmra.mxu0 %v260
    %v426 = vpop.f32.mrf.mxu0
    %v427 = vadd.f32 %v407, %v426
    %428 = vdwg.mxu0
    %v429 = vmax.f32 %v427, 0.0
    %v430 = vld [vmem:[#allocation7] sm:$0xff]
    %v431 = vld [vmem:[#allocation7 + $0x8] sm:$0xff]
    %v432 = vld [vmem:[#allocation7 + $0x10] sm:$0xff]
    %v433 = vld [vmem:[#allocation7 + $0x18] sm:$0xff]
    %v434 = vld [vmem:[#allocation7 + $0x20] sm:$0xff]
    %v435 = vld [vmem:[#allocation7 + $0x28] sm:$0xff]
    %v436 = vld [vmem:[#allocation7 + $0x30] sm:$0xff]
    %v437 = vld [vmem:[#allocation7 + $0x38] sm:$0xff]
    %v438 = vld [vmem:[#allocation7 + $0x40] sm:$0xff]
    %v439 = vld [vmem:[#allocation7 + $0x48] sm:$0xff]
    %v440 = vld [vmem:[#allocation7 + $0x50] sm:$0xff]
    %v441 = vld [vmem:[#allocation7 + $0x58] sm:$0xff]
    %v442 = vld [vmem:[#allocation7 + $0x60] sm:$0xff]
    %v443 = vld [vmem:[#allocation7 + $0x68] sm:$0xff]
    %v444 = vld [vmem:[#allocation7 + $0x70] sm:$0xff]
    %v445 = vld [vmem:[#allocation7 + $0x78] sm:$0xff]
    %v446 = vld [vmem:[%s4] sm:$0x1]
    %v448 = vperm.slane %v446, 0
    %450 = vmatpush.msra.mxu0 %v445
    %451 = vmatpush.msra.mxu0 %v444
    %452 = vmatpush.msra.mxu0 %v443
    %453 = vmatpush.msra.mxu0 %v442
    %454 = vmatpush.msra.mxu0 %v441
    %455 = vmatpush.msra.mxu0 %v440
    %456 = vmatpush.msra.mxu0 %v439
    %457 = vmatpush.msra.mxu0 %v438
    %458 = vmatpush.msra.mxu0 %v437
    %459 = vmatpush.msra.mxu0 %v436
    %460 = vmatpush.msra.mxu0 %v435
    %461 = vmatpush.msra.mxu0 %v434
    %462 = vmatpush.msra.mxu0 %v433
    %463 = vmatpush.msra.mxu0 %v432
    %464 = vmatpush.msra.mxu0 %v431
    %465 = vmatpush.msra.mxu0 %v430
    %466 = vmatmul.f32.gmra.mxu0 %v429
    %v467 = vpop.f32.mrf.mxu0
    %v468 = vadd.f32 %v448, %v467
    %469 = vdwg.mxu0
    %v470 = vmax.f32 %v468, 0.0
    %v471 = vld [vmem:[#allocation8] sm:$0xff]
    %v472 = vld [vmem:[#allocation8 + $0x8] sm:$0xff]
    %v473 = vld [vmem:[#allocation8 + $0x10] sm:$0xff]
    %v474 = vld [vmem:[#allocation8 + $0x18] sm:$0xff]
    %v475 = vld [vmem:[#allocation8 + $0x20] sm:$0xff]
    %v476 = vld [vmem:[#allocation8 + $0x28] sm:$0xff]
    %v477 = vld [vmem:[#allocation8 + $0x30] sm:$0xff]
    %v478 = vld [vmem:[#allocation8 + $0x38] sm:$0xff]
    %v479 = vld [vmem:[#allocation8 + $0x40] sm:$0xff]
    %v480 = vld [vmem:[#allocation8 + $0x48] sm:$0xff]
    %v481 = vld [vmem:[#allocation8 + $0x50] sm:$0xff]
    %v482 = vld [vmem:[#allocation8 + $0x58] sm:$0xff]
    %v483 = vld [vmem:[#allocation8 + $0x60] sm:$0xff]
    %v484 = vld [vmem:[#allocation8 + $0x68] sm:$0xff]
    %v485 = vld [vmem:[#allocation8 + $0x70] sm:$0xff]
    %v486 = vld [vmem:[#allocation8 + $0x78] sm:$0xff]
    %v487 = vld [vmem:[%s6] sm:$0x1]
    %v489 = vperm.slane %v487, 0
    %491 = vmatpush.msra.mxu0 %v486
    %492 = vmatpush.msra.mxu0 %v485
    %493 = vmatpush.msra.mxu0 %v484
    %494 = vmatpush.msra.mxu0 %v483
    %495 = vmatpush.msra.mxu0 %v482
    %496 = vmatpush.msra.mxu0 %v481
    %497 = vmatpush.msra.mxu0 %v480
    %498 = vmatpush.msra.mxu0 %v479
    %499 = vmatpush.msra.mxu0 %v478
    %500 = vmatpush.msra.mxu0 %v477
    %501 = vmatpush.msra.mxu0 %v476
    %502 = vmatpush.msra.mxu0 %v475
    %503 = vmatpush.msra.mxu0 %v474
    %504 = vmatpush.msra.mxu0 %v473
    %505 = vmatpush.msra.mxu0 %v472
    %506 = vmatpush.msra.mxu0 %v471
    %507 = vmatmul.f32.gmra.mxu0 %v470
    %v508 = vpop.f32.mrf.mxu0
    %v509 = vadd.f32 %v489, %v508
    %510 = vdwg.mxu0
    %511 = vst [vmem:[#allocation10] sm:$0xff] %v509
    // Predicated region
    $region46: #{tpu_custom_call.1} parent=1 // pred_check
      _
    $region47: #{tpu_custom_call.1} parent=1 // pred_check_branch
      %513 = sbr.rel (0) target = $region49
    $region48: #{tpu_custom_call.1} parent=1 // pred_region
      %515 = vsyncadd [#allocation4], 96
      %s516 = sshll.u32 [#allocation10], 4
      %s517 = int_to_ptr.vmem [resolvable:$true] %s516
      %s518 = sshll.u32 %s7, 4
      %s519 = int_to_ptr.hbm [resolvable:$true] %s518
      %524 = dma.vmem_to_hbm [thread:$0]  %s517, 32, %s519, [#allocation4], 32, 32, 2
    $region49: #{tpu_custom_call.1} parent=1 // pred_fallthru
      _
    // Predicated region
    $region50: #{tpu_custom_call.1} parent=1 // pred_check
      _
    $region51: #{tpu_custom_call.1} parent=1 // pred_check_branch
      %526 = sbr.rel (0) target = $region53
    $region52: #{tpu_custom_call.1} parent=1 // pred_region
      %528 = dma.done [#allocation4], 128
    $region53: #{tpu_custom_call.1} parent=1 // pred_fallthru
      _
    %529 = vsyncpa [#allocation3], 1
    %530 = vsyncpa [#allocation6], 1
    %531 = vsyncpa [#allocation9], 1
    %532 = vsyncpa [#allocation4], 1

</llo_original>
